<compile_context>
chip_gen: v7x
topology: tpu7x:2x2x1
jax: 0.10.0
libtpu: 0.0.40
codegen_flags: <defaults>
</compile_context>

<pallas_src>
import jax
import jax.numpy as jnp
from jax.experimental import pallas as pl
from jax.experimental.pallas import tpu as pltpu

# Model dimensions (from the PyTorch module).
HIDDEN_N = 32
CITIES_N = 4
DAYS_N = 14
FEATURES_N = 5
INPUT_N = DAYS_N * FEATURES_N * CITIES_N          # 280
OUTPUT_N = FEATURES_N * CITIES_N                  # 20
OUT_PAD = 128                                     # lane-dense padded output width
N_HIDDEN_LAYERS = 8

LEAKY_SLOPE = 0.01  # torch.nn.LeakyReLU default negative_slope


def _round_up(x, m):
    return ((x + m - 1) // m) * m


def _act_dtype():
    """bf16 activations on chips with a bf16 VPU (v6e / v7x), f32 otherwise."""
    try:
        kind = jax.devices()[0].device_kind.lower()
    except Exception:
        return jnp.float32
    if any(t in kind for t in ("v2", "v3", "v4", "v5")):
        return jnp.float32
    return jnp.bfloat16


def _make_net_kernel(act_dtype):
    def _net_kernel(x_ref, w_in_ref, wh_ref, bh_ref, w_out_ref, b_out_ref, out_ref):
        """Forward pass on one (TM, 280) batch tile. All refs live in VMEM.

        x_ref     : (TM, 280)  f32   (cast to bf16 in-kernel at the MXU boundary)
        w_in_ref  : (280, 32)  bf16
        wh_ref    : (8, 32, 32) bf16  (hidden_layer1..8, stored (in, out))
        bh_ref    : (9, 32)    f32   (row 0 = input bias, rows 1..8 = hidden biases)
        w_out_ref : (32, 128)  bf16  (output weight, zero-padded 20 -> 128)
        b_out_ref : (1, 128)   f32   (output bias, zero-padded)
        out_ref   : (TM, 128)  f32
        """

        def leaky(v):
            return jnp.where(v > 0, v, LEAKY_SLOPE * v)

        def matmul(h, w):
            # bf16 MXU inputs, f32 accumulation.
            return jnp.dot(h.astype(jnp.bfloat16), w,
                           preferred_element_type=jnp.float32)

        def hidden(h, k, skip=None):
            y = matmul(h, wh_ref[k]) + bh_ref[k + 1:k + 2, :]   # f32 accumulate + bias
            y = y.astype(act_dtype)
            if skip is not None:
                y = y + skip
            return leaky(y)

        x = x_ref[...]                                              # (TM, 280) f32
        h = matmul(x, w_in_ref[...]) + bh_ref[0:1, :]               # input_layer (f32)
        h = leaky(h.astype(act_dtype))
        skip = h
        h = hidden(h, 0)                                            # hidden1
        h = hidden(h, 1, skip)                                      # hidden2 + skip
        skip = h
        h = hidden(h, 2)                                            # hidden3
        h = hidden(h, 3, skip)                                      # hidden4 + skip
        skip = h
        h = hidden(h, 4)                                            # hidden5
        h = hidden(h, 5, skip)                                      # hidden6 + skip
        skip = h
        h = hidden(h, 6)                                            # hidden7
        h = hidden(h, 7, skip)                                      # hidden8 + skip
        out_ref[...] = (matmul(h, w_out_ref[...]) + b_out_ref[...]).astype(out_ref.dtype)

    return _net_kernel


def pack_params(params):
    """Pack the 10 (w_t, b) pairs into 5 arrays (bf16 weights, f32 biases)."""
    w_in, b_in = params[0]
    hidden = params[1:1 + N_HIDDEN_LAYERS]
    w_out, b_out = params[9]

    w_in_bf = w_in.astype(jnp.bfloat16)                                      # (280, 32)
    wh = jnp.stack([w for (w, _) in hidden]).astype(jnp.bfloat16)            # (8, 32, 32)
    bh = jnp.stack([b_in] + [b for (_, b) in hidden]).astype(jnp.float32)    # (9, 32)
    w_out_p = jnp.zeros((HIDDEN_N, OUT_PAD), jnp.bfloat16)
    w_out_p = w_out_p.at[:, :OUTPUT_N].set(w_out.astype(jnp.bfloat16))       # (32, 128)
    b_out_p = jnp.zeros((1, OUT_PAD), jnp.float32)
    b_out_p = b_out_p.at[0, :OUTPUT_N].set(b_out.astype(jnp.float32))        # (1, 128)
    return w_in_bf, wh, bh, w_out_p, b_out_p


def _choose_tile(B, tile_m):
    """Pick a batch tile (multiple of 16) and padded batch.

    Ensures >= 2 grid steps when B >= 32 so the 'parallel' axis can be sharded
    across both TensorCores on v7x."""
    tm = min(tile_m, _round_up(B, 16))
    if B >= 32 and _round_up(B, tm) == tm:        # would collapse to a single step
        tm = max(16, _round_up(-(-tm // 2), 16))
    b_pad = _round_up(B, tm)
    return tm, b_pad


def net_forward(x, params, *, tile_m=512, act_dtype=None):
    """x: (B, DAYS_N, FEATURES_N, CITIES_N) or (DAYS_N, FEATURES_N, CITIES_N).
    Returns (B, OUTPUT_N) (or (OUTPUT_N,) for the unbatched case), f32."""
    if act_dtype is None:
        act_dtype = _act_dtype()

    single = (x.ndim == 3)
    if single:
        x = x[None]
    B = x.shape[0]

    x2 = x.reshape(B, INPUT_N).astype(jnp.float32)   # f32 straight into the kernel
    tm, b_pad = _choose_tile(B, tile_m)
    if b_pad != B:
        # Ragged tail only; common case (B multiple of tm) takes the no-copy path.
        x2 = jnp.pad(x2, ((0, b_pad - B), (0, 0)))

    w_in, wh, bh, w_out_p, b_out_p = pack_params(params)

    def resident(shape):
        n = len(shape)
        return pl.BlockSpec(shape, lambda i: (0,) * n)   # VMEM-resident across grid

    n_param_bytes = sum(int(a.size) * a.dtype.itemsize
                        for a in (w_in, wh, bh, w_out_p, b_out_p))
    cost = pl.CostEstimate(
        flops=2 * b_pad * (INPUT_N * HIDDEN_N
                           + N_HIDDEN_LAYERS * HIDDEN_N * HIDDEN_N
                           + HIDDEN_N * OUT_PAD),
        transcendentals=0,
        bytes_accessed=int(x2.size) * x2.dtype.itemsize
                       + b_pad * OUT_PAD * 4
                       + n_param_bytes,
    )

    out = pl.pallas_call(
        _make_net_kernel(act_dtype),
        out_shape=jax.ShapeDtypeStruct((b_pad, OUT_PAD), jnp.float32),
        grid=(b_pad // tm,),
        in_specs=[
            pl.BlockSpec((tm, INPUT_N), lambda i: (i, 0)),        # x tile (f32)
            resident((INPUT_N, HIDDEN_N)),                        # w_in
            resident((N_HIDDEN_LAYERS, HIDDEN_N, HIDDEN_N)),      # hidden weights
            resident((N_HIDDEN_LAYERS + 1, HIDDEN_N)),            # biases (in + hidden)
            resident((HIDDEN_N, OUT_PAD)),                        # w_out (padded)
            resident((1, OUT_PAD)),                               # b_out (padded)
        ],
        out_specs=pl.BlockSpec((tm, OUT_PAD), lambda i: (i, 0)),
        compiler_params=pltpu.CompilerParams(
            dimension_semantics=("parallel",)),
        cost_estimate=cost,
    )(x2, w_in, wh, bh, w_out_p, b_out_p)

    out = out[:B, :OUTPUT_N]
    if single:
        out = out[0]
    return out


def init_params(key):
    """Deterministic init mimicking torch.nn.Linear defaults:
    weight, bias ~ U(-1/sqrt(fan_in), 1/sqrt(fan_in)).
    Weights are stored already transposed as (in, out)."""
    dims = [(INPUT_N, HIDDEN_N)] + [(HIDDEN_N, HIDDEN_N)] * 8 + [(HIDDEN_N, OUTPUT_N)]
    params = []
    for (fan_in, fan_out) in dims:
        key, kw, kb = jax.random.split(key, 3)
        bound = 1.0 / (fan_in ** 0.5)
        w_t = jax.random.uniform(kw, (fan_in, fan_out), jnp.float32, -bound, bound)
        b = jax.random.uniform(kb, (fan_out,), jnp.float32, -bound, bound)
        params.append((w_t, b))
    return params


def net_forward_ref(x, params, act_dtype=None):
    """Pure-JAX batched reference using the same bf16-matmul / act_dtype
    elementwise recipe as the kernel (tight correctness check)."""
    if act_dtype is None:
        act_dtype = _act_dtype()

    def leaky(v):
        return jnp.where(v > 0, v, LEAKY_SLOPE * v)

    def linear(v, p):
        w_t, b = p
        return jnp.dot(v.astype(jnp.bfloat16), w_t.astype(jnp.bfloat16),
                       preferred_element_type=jnp.float32) + b.astype(jnp.float32)

    def block(h, p, skip=None):
        y = linear(h, p).astype(act_dtype)
        if skip is not None:
            y = y + skip
        return leaky(y)

    h = x.reshape(x.shape[0], -1).astype(jnp.float32)
    h = leaky(linear(h, params[0]).astype(act_dtype))
    skip = h
    h = block(h, params[1])
    h = block(h, params[2], skip)
    skip = h
    h = block(h, params[3])
    h = block(h, params[4], skip)
    skip = h
    h = block(h, params[5])
    h = block(h, params[6], skip)
    skip = h
    h = block(h, params[7])
    h = block(h, params[8], skip)
    return linear(h, params[9])


if __name__ == "__main__":
    key = jax.random.PRNGKey(0)
    key, kx = jax.random.split(key)

    B = 16  # small batch; wrapper pads/tiles arbitrary B
    x = jax.random.normal(kx, (B, DAYS_N, FEATURES_N, CITIES_N), jnp.float32)
    params = init_params(key)

    out = net_forward(x, params)
    out = jax.block_until_ready(out)
    assert out.shape == (B, OUTPUT_N), out.shape

    ref = net_forward_ref(x, params)
    assert jnp.allclose(out, ref, atol=2e-2, rtol=2e-2), (out, ref)

    # Also exercise the unbatched (single-sample) path of the original module.
    out1 = jax.block_until_ready(net_forward(x[0], params))
    assert out1.shape == (OUTPUT_N,)
    assert jnp.allclose(out1, ref[0], atol=2e-2, rtol=2e-2), (out1, ref[0])

    print("KERNEL_OK")
</pallas_src>

<mosaic_0001>
module attributes {stable_mosaic.version = 11 : i64} {
  func.func @_net_kernel(%arg0: i32, %arg1: memref<16x280xf32, #tpu.memory_space<vmem>>, %arg2: memref<280x32xbf16, #tpu.memory_space<vmem>>, %arg3: memref<8x32x32xbf16, #tpu.memory_space<vmem>>, %arg4: memref<9x32xf32, #tpu.memory_space<vmem>>, %arg5: memref<32x128xbf16, #tpu.memory_space<vmem>>, %arg6: memref<1x128xf32, #tpu.memory_space<vmem>>, %arg7: memref<16x128xf32, #tpu.memory_space<vmem>>) attributes {dimension_semantics = [#tpu.dimension_semantics<parallel>], iteration_bounds = array<i64: 1>, scalar_prefetch = 0 : i64, scratch_operands = 0 : i64, tpu.core_type = #tpu.core_type<tc>, window_params = [{transform_indices = @transform_0, window_bounds = array<i64: 16, 280>}, {pipeline_mode = #tpu.pipeline_mode<synchronous>, transform_indices = @transform_1, window_bounds = array<i64: 280, 32>}, {pipeline_mode = #tpu.pipeline_mode<synchronous>, transform_indices = @transform_2, window_bounds = array<i64: 8, 32, 32>}, {pipeline_mode = #tpu.pipeline_mode<synchronous>, transform_indices = @transform_3, window_bounds = array<i64: 9, 32>}, {pipeline_mode = #tpu.pipeline_mode<synchronous>, transform_indices = @transform_4, window_bounds = array<i64: 32, 128>}, {pipeline_mode = #tpu.pipeline_mode<synchronous>, transform_indices = @transform_5, window_bounds = array<i64: 1, 128>}, {transform_indices = @transform_6, window_bounds = array<i64: 16, 128>}]} {
    %c0 = arith.constant 0 : index
    %c0_0 = arith.constant 0 : index
    %0 = vector.load %arg1[%c0, %c0_0] : memref<16x280xf32, #tpu.memory_space<vmem>>, vector<16x280xf32>
    %c0_1 = arith.constant 0 : index
    %c0_2 = arith.constant 0 : index
    %1 = vector.load %arg2[%c0_1, %c0_2] : memref<280x32xbf16, #tpu.memory_space<vmem>>, vector<280x32xbf16>
    %2 = arith.truncf %0 : vector<16x280xf32> to vector<16x280xbf16>
    %cst = arith.constant dense<0.000000e+00> : vector<16x32xf32>
    %3 = tpu.matmul %2, %1, %cst {dimension_numbers = #tpu.dot_dimension_numbers<[1], [0], [0], [1], [0, 0, 1, 1], [], []>} : vector<16x280xbf16>, vector<280x32xbf16>, vector<16x32xf32> -> vector<16x32xf32>
    %c0_3 = arith.constant 0 : index
    %c0_4 = arith.constant 0 : index
    %4 = vector.load %arg4[%c0_3, %c0_4] : memref<9x32xf32, #tpu.memory_space<vmem>>, vector<1x32xf32>
    %5 = vector.broadcast %4 : vector<1x32xf32> to vector<16x32xf32>
    %6 = arith.addf %3, %5 : vector<16x32xf32>
    %7 = arith.truncf %6 : vector<16x32xf32> to vector<16x32xbf16>
    %cst_5 = arith.constant 0.000000e+00 : bf16
    %8 = vector.broadcast %cst_5 : bf16 to vector<16x32xbf16>
    %9 = arith.cmpf ogt, %7, %8 : vector<16x32xbf16>
    %cst_6 = arith.constant 1.000980e-02 : bf16
    %10 = vector.broadcast %cst_6 : bf16 to vector<16x32xbf16>
    %11 = arith.mulf %10, %7 : vector<16x32xbf16>
    %12 = arith.select %9, %7, %11 : vector<16x32xi1>, vector<16x32xbf16>
    %c0_7 = arith.constant 0 : index
    %c0_8 = arith.constant 0 : index
    %c0_9 = arith.constant 0 : index
    %13 = vector.load %arg3[%c0_7, %c0_8, %c0_9] : memref<8x32x32xbf16, #tpu.memory_space<vmem>>, vector<1x32x32xbf16>
    %14 = vector.shape_cast %13 : vector<1x32x32xbf16> to vector<32x32xbf16>
    %cst_10 = arith.constant dense<0.000000e+00> : vector<16x32xf32>
    %15 = tpu.matmul %12, %14, %cst_10 {dimension_numbers = #tpu.dot_dimension_numbers<[1], [0], [0], [1], [0, 0, 1, 1], [], []>} : vector<16x32xbf16>, vector<32x32xbf16>, vector<16x32xf32> -> vector<16x32xf32>
    %c1 = arith.constant 1 : index
    %c0_11 = arith.constant 0 : index
    %16 = vector.load %arg4[%c1, %c0_11] : memref<9x32xf32, #tpu.memory_space<vmem>>, vector<1x32xf32>
    %17 = vector.broadcast %16 : vector<1x32xf32> to vector<16x32xf32>
    %18 = arith.addf %15, %17 : vector<16x32xf32>
    %19 = arith.truncf %18 : vector<16x32xf32> to vector<16x32xbf16>
    %cst_12 = arith.constant 0.000000e+00 : bf16
    %20 = vector.broadcast %cst_12 : bf16 to vector<16x32xbf16>
    %21 = arith.cmpf ogt, %19, %20 : vector<16x32xbf16>
    %cst_13 = arith.constant 1.000980e-02 : bf16
    %22 = vector.broadcast %cst_13 : bf16 to vector<16x32xbf16>
    %23 = arith.mulf %22, %19 : vector<16x32xbf16>
    %24 = arith.select %21, %19, %23 : vector<16x32xi1>, vector<16x32xbf16>
    %c1_14 = arith.constant 1 : index
    %c0_15 = arith.constant 0 : index
    %c0_16 = arith.constant 0 : index
    %25 = vector.load %arg3[%c1_14, %c0_15, %c0_16] : memref<8x32x32xbf16, #tpu.memory_space<vmem>>, vector<1x32x32xbf16>
    %26 = vector.shape_cast %25 : vector<1x32x32xbf16> to vector<32x32xbf16>
    %cst_17 = arith.constant dense<0.000000e+00> : vector<16x32xf32>
    %27 = tpu.matmul %24, %26, %cst_17 {dimension_numbers = #tpu.dot_dimension_numbers<[1], [0], [0], [1], [0, 0, 1, 1], [], []>} : vector<16x32xbf16>, vector<32x32xbf16>, vector<16x32xf32> -> vector<16x32xf32>
    %c2 = arith.constant 2 : index
    %c0_18 = arith.constant 0 : index
    %28 = vector.load %arg4[%c2, %c0_18] : memref<9x32xf32, #tpu.memory_space<vmem>>, vector<1x32xf32>
    %29 = vector.broadcast %28 : vector<1x32xf32> to vector<16x32xf32>
    %30 = arith.addf %27, %29 : vector<16x32xf32>
    %31 = arith.truncf %30 : vector<16x32xf32> to vector<16x32xbf16>
    %32 = arith.addf %31, %12 : vector<16x32xbf16>
    %cst_19 = arith.constant 0.000000e+00 : bf16
    %33 = vector.broadcast %cst_19 : bf16 to vector<16x32xbf16>
    %34 = arith.cmpf ogt, %32, %33 : vector<16x32xbf16>
    %cst_20 = arith.constant 1.000980e-02 : bf16
    %35 = vector.broadcast %cst_20 : bf16 to vector<16x32xbf16>
    %36 = arith.mulf %35, %32 : vector<16x32xbf16>
    %37 = arith.select %34, %32, %36 : vector<16x32xi1>, vector<16x32xbf16>
    %c2_21 = arith.constant 2 : index
    %c0_22 = arith.constant 0 : index
    %c0_23 = arith.constant 0 : index
    %38 = vector.load %arg3[%c2_21, %c0_22, %c0_23] : memref<8x32x32xbf16, #tpu.memory_space<vmem>>, vector<1x32x32xbf16>
    %39 = vector.shape_cast %38 : vector<1x32x32xbf16> to vector<32x32xbf16>
    %cst_24 = arith.constant dense<0.000000e+00> : vector<16x32xf32>
    %40 = tpu.matmul %37, %39, %cst_24 {dimension_numbers = #tpu.dot_dimension_numbers<[1], [0], [0], [1], [0, 0, 1, 1], [], []>} : vector<16x32xbf16>, vector<32x32xbf16>, vector<16x32xf32> -> vector<16x32xf32>
    %c3 = arith.constant 3 : index
    %c0_25 = arith.constant 0 : index
    %41 = vector.load %arg4[%c3, %c0_25] : memref<9x32xf32, #tpu.memory_space<vmem>>, vector<1x32xf32>
    %42 = vector.broadcast %41 : vector<1x32xf32> to vector<16x32xf32>
    %43 = arith.addf %40, %42 : vector<16x32xf32>
    %44 = arith.truncf %43 : vector<16x32xf32> to vector<16x32xbf16>
    %cst_26 = arith.constant 0.000000e+00 : bf16
    %45 = vector.broadcast %cst_26 : bf16 to vector<16x32xbf16>
    %46 = arith.cmpf ogt, %44, %45 : vector<16x32xbf16>
    %cst_27 = arith.constant 1.000980e-02 : bf16
    %47 = vector.broadcast %cst_27 : bf16 to vector<16x32xbf16>
    %48 = arith.mulf %47, %44 : vector<16x32xbf16>
    %49 = arith.select %46, %44, %48 : vector<16x32xi1>, vector<16x32xbf16>
    %c3_28 = arith.constant 3 : index
    %c0_29 = arith.constant 0 : index
    %c0_30 = arith.constant 0 : index
    %50 = vector.load %arg3[%c3_28, %c0_29, %c0_30] : memref<8x32x32xbf16, #tpu.memory_space<vmem>>, vector<1x32x32xbf16>
    %51 = vector.shape_cast %50 : vector<1x32x32xbf16> to vector<32x32xbf16>
    %cst_31 = arith.constant dense<0.000000e+00> : vector<16x32xf32>
    %52 = tpu.matmul %49, %51, %cst_31 {dimension_numbers = #tpu.dot_dimension_numbers<[1], [0], [0], [1], [0, 0, 1, 1], [], []>} : vector<16x32xbf16>, vector<32x32xbf16>, vector<16x32xf32> -> vector<16x32xf32>
    %c4 = arith.constant 4 : index
    %c0_32 = arith.constant 0 : index
    %53 = vector.load %arg4[%c4, %c0_32] : memref<9x32xf32, #tpu.memory_space<vmem>>, vector<1x32xf32>
    %54 = vector.broadcast %53 : vector<1x32xf32> to vector<16x32xf32>
    %55 = arith.addf %52, %54 : vector<16x32xf32>
    %56 = arith.truncf %55 : vector<16x32xf32> to vector<16x32xbf16>
    %57 = arith.addf %56, %37 : vector<16x32xbf16>
    %cst_33 = arith.constant 0.000000e+00 : bf16
    %58 = vector.broadcast %cst_33 : bf16 to vector<16x32xbf16>
    %59 = arith.cmpf ogt, %57, %58 : vector<16x32xbf16>
    %cst_34 = arith.constant 1.000980e-02 : bf16
    %60 = vector.broadcast %cst_34 : bf16 to vector<16x32xbf16>
    %61 = arith.mulf %60, %57 : vector<16x32xbf16>
    %62 = arith.select %59, %57, %61 : vector<16x32xi1>, vector<16x32xbf16>
    %c4_35 = arith.constant 4 : index
    %c0_36 = arith.constant 0 : index
    %c0_37 = arith.constant 0 : index
    %63 = vector.load %arg3[%c4_35, %c0_36, %c0_37] : memref<8x32x32xbf16, #tpu.memory_space<vmem>>, vector<1x32x32xbf16>
    %64 = vector.shape_cast %63 : vector<1x32x32xbf16> to vector<32x32xbf16>
    %cst_38 = arith.constant dense<0.000000e+00> : vector<16x32xf32>
    %65 = tpu.matmul %62, %64, %cst_38 {dimension_numbers = #tpu.dot_dimension_numbers<[1], [0], [0], [1], [0, 0, 1, 1], [], []>} : vector<16x32xbf16>, vector<32x32xbf16>, vector<16x32xf32> -> vector<16x32xf32>
    %c5 = arith.constant 5 : index
    %c0_39 = arith.constant 0 : index
    %66 = vector.load %arg4[%c5, %c0_39] : memref<9x32xf32, #tpu.memory_space<vmem>>, vector<1x32xf32>
    %67 = vector.broadcast %66 : vector<1x32xf32> to vector<16x32xf32>
    %68 = arith.addf %65, %67 : vector<16x32xf32>
    %69 = arith.truncf %68 : vector<16x32xf32> to vector<16x32xbf16>
    %cst_40 = arith.constant 0.000000e+00 : bf16
    %70 = vector.broadcast %cst_40 : bf16 to vector<16x32xbf16>
    %71 = arith.cmpf ogt, %69, %70 : vector<16x32xbf16>
    %cst_41 = arith.constant 1.000980e-02 : bf16
    %72 = vector.broadcast %cst_41 : bf16 to vector<16x32xbf16>
    %73 = arith.mulf %72, %69 : vector<16x32xbf16>
    %74 = arith.select %71, %69, %73 : vector<16x32xi1>, vector<16x32xbf16>
    %c5_42 = arith.constant 5 : index
    %c0_43 = arith.constant 0 : index
    %c0_44 = arith.constant 0 : index
    %75 = vector.load %arg3[%c5_42, %c0_43, %c0_44] : memref<8x32x32xbf16, #tpu.memory_space<vmem>>, vector<1x32x32xbf16>
    %76 = vector.shape_cast %75 : vector<1x32x32xbf16> to vector<32x32xbf16>
    %cst_45 = arith.constant dense<0.000000e+00> : vector<16x32xf32>
    %77 = tpu.matmul %74, %76, %cst_45 {dimension_numbers = #tpu.dot_dimension_numbers<[1], [0], [0], [1], [0, 0, 1, 1], [], []>} : vector<16x32xbf16>, vector<32x32xbf16>, vector<16x32xf32> -> vector<16x32xf32>
    %c6 = arith.constant 6 : index
    %c0_46 = arith.constant 0 : index
    %78 = vector.load %arg4[%c6, %c0_46] : memref<9x32xf32, #tpu.memory_space<vmem>>, vector<1x32xf32>
    %79 = vector.broadcast %78 : vector<1x32xf32> to vector<16x32xf32>
    %80 = arith.addf %77, %79 : vector<16x32xf32>
    %81 = arith.truncf %80 : vector<16x32xf32> to vector<16x32xbf16>
    %82 = arith.addf %81, %62 : vector<16x32xbf16>
    %cst_47 = arith.constant 0.000000e+00 : bf16
    %83 = vector.broadcast %cst_47 : bf16 to vector<16x32xbf16>
    %84 = arith.cmpf ogt, %82, %83 : vector<16x32xbf16>
    %cst_48 = arith.constant 1.000980e-02 : bf16
    %85 = vector.broadcast %cst_48 : bf16 to vector<16x32xbf16>
    %86 = arith.mulf %85, %82 : vector<16x32xbf16>
    %87 = arith.select %84, %82, %86 : vector<16x32xi1>, vector<16x32xbf16>
    %c6_49 = arith.constant 6 : index
    %c0_50 = arith.constant 0 : index
    %c0_51 = arith.constant 0 : index
    %88 = vector.load %arg3[%c6_49, %c0_50, %c0_51] : memref<8x32x32xbf16, #tpu.memory_space<vmem>>, vector<1x32x32xbf16>
    %89 = vector.shape_cast %88 : vector<1x32x32xbf16> to vector<32x32xbf16>
    %cst_52 = arith.constant dense<0.000000e+00> : vector<16x32xf32>
    %90 = tpu.matmul %87, %89, %cst_52 {dimension_numbers = #tpu.dot_dimension_numbers<[1], [0], [0], [1], [0, 0, 1, 1], [], []>} : vector<16x32xbf16>, vector<32x32xbf16>, vector<16x32xf32> -> vector<16x32xf32>
    %c7 = arith.constant 7 : index
    %c0_53 = arith.constant 0 : index
    %91 = vector.load %arg4[%c7, %c0_53] : memref<9x32xf32, #tpu.memory_space<vmem>>, vector<1x32xf32>
    %92 = vector.broadcast %91 : vector<1x32xf32> to vector<16x32xf32>
    %93 = arith.addf %90, %92 : vector<16x32xf32>
    %94 = arith.truncf %93 : vector<16x32xf32> to vector<16x32xbf16>
    %cst_54 = arith.constant 0.000000e+00 : bf16
    %95 = vector.broadcast %cst_54 : bf16 to vector<16x32xbf16>
    %96 = arith.cmpf ogt, %94, %95 : vector<16x32xbf16>
    %cst_55 = arith.constant 1.000980e-02 : bf16
    %97 = vector.broadcast %cst_55 : bf16 to vector<16x32xbf16>
    %98 = arith.mulf %97, %94 : vector<16x32xbf16>
    %99 = arith.select %96, %94, %98 : vector<16x32xi1>, vector<16x32xbf16>
    %c7_56 = arith.constant 7 : index
    %c0_57 = arith.constant 0 : index
    %c0_58 = arith.constant 0 : index
    %100 = vector.load %arg3[%c7_56, %c0_57, %c0_58] : memref<8x32x32xbf16, #tpu.memory_space<vmem>>, vector<1x32x32xbf16>
    %101 = vector.shape_cast %100 : vector<1x32x32xbf16> to vector<32x32xbf16>
    %cst_59 = arith.constant dense<0.000000e+00> : vector<16x32xf32>
    %102 = tpu.matmul %99, %101, %cst_59 {dimension_numbers = #tpu.dot_dimension_numbers<[1], [0], [0], [1], [0, 0, 1, 1], [], []>} : vector<16x32xbf16>, vector<32x32xbf16>, vector<16x32xf32> -> vector<16x32xf32>
    %c8 = arith.constant 8 : index
    %c0_60 = arith.constant 0 : index
    %103 = vector.load %arg4[%c8, %c0_60] : memref<9x32xf32, #tpu.memory_space<vmem>>, vector<1x32xf32>
    %104 = vector.broadcast %103 : vector<1x32xf32> to vector<16x32xf32>
    %105 = arith.addf %102, %104 : vector<16x32xf32>
    %106 = arith.truncf %105 : vector<16x32xf32> to vector<16x32xbf16>
    %107 = arith.addf %106, %87 : vector<16x32xbf16>
    %cst_61 = arith.constant 0.000000e+00 : bf16
    %108 = vector.broadcast %cst_61 : bf16 to vector<16x32xbf16>
    %109 = arith.cmpf ogt, %107, %108 : vector<16x32xbf16>
    %cst_62 = arith.constant 1.000980e-02 : bf16
    %110 = vector.broadcast %cst_62 : bf16 to vector<16x32xbf16>
    %111 = arith.mulf %110, %107 : vector<16x32xbf16>
    %112 = arith.select %109, %107, %111 : vector<16x32xi1>, vector<16x32xbf16>
    %c0_63 = arith.constant 0 : index
    %c0_64 = arith.constant 0 : index
    %113 = vector.load %arg5[%c0_63, %c0_64] : memref<32x128xbf16, #tpu.memory_space<vmem>>, vector<32x128xbf16>
    %cst_65 = arith.constant dense<0.000000e+00> : vector<16x128xf32>
    %114 = tpu.matmul %112, %113, %cst_65 {dimension_numbers = #tpu.dot_dimension_numbers<[1], [0], [0], [1], [0, 0, 1, 1], [], []>} : vector<16x32xbf16>, vector<32x128xbf16>, vector<16x128xf32> -> vector<16x128xf32>
    %c0_66 = arith.constant 0 : index
    %c0_67 = arith.constant 0 : index
    %115 = vector.load %arg6[%c0_66, %c0_67] : memref<1x128xf32, #tpu.memory_space<vmem>>, vector<1x128xf32>
    %116 = vector.broadcast %115 : vector<1x128xf32> to vector<16x128xf32>
    %117 = arith.addf %114, %116 : vector<16x128xf32>
    %c0_68 = arith.constant 0 : index
    %c0_69 = arith.constant 0 : index
    %118 = vector.load %arg7[%c0_68, %c0_69] : memref<16x128xf32, #tpu.memory_space<vmem>>, vector<16x128xf32>
    tpu.vector_store %arg7[%c0_68, %c0_69], %117 {strides = array<i32>} : memref<16x128xf32, #tpu.memory_space<vmem>>, vector<16x128xf32>,
    return
  }
  func.func @transform_0(%arg0: i32) -> (i32, i32) {
    %c0_i32 = arith.constant 0 : i32
    %c0_i32_0 = arith.constant 0 : i32
    return %arg0, %c0_i32 : i32, i32
  }
  func.func @transform_1(%arg0: i32) -> (i32, i32) {
    %c0_i32 = arith.constant 0 : i32
    %c0_i32_0 = arith.constant 0 : i32
    %c0_i32_1 = arith.constant 0 : i32
    return %c0_i32, %c0_i32_0 : i32, i32
  }
  func.func @transform_2(%arg0: i32) -> (i32, i32, i32) {
    %c0_i32 = arith.constant 0 : i32
    %c0_i32_0 = arith.constant 0 : i32
    %c0_i32_1 = arith.constant 0 : i32
    %c0_i32_2 = arith.constant 0 : i32
    return %c0_i32, %c0_i32_0, %c0_i32_1 : i32, i32, i32
  }
  func.func @transform_3(%arg0: i32) -> (i32, i32) {
    %c0_i32 = arith.constant 0 : i32
    %c0_i32_0 = arith.constant 0 : i32
    %c0_i32_1 = arith.constant 0 : i32
    return %c0_i32, %c0_i32_0 : i32, i32
  }
  func.func @transform_4(%arg0: i32) -> (i32, i32) {
    %c0_i32 = arith.constant 0 : i32
    %c0_i32_0 = arith.constant 0 : i32
    %c0_i32_1 = arith.constant 0 : i32
    return %c0_i32, %c0_i32_0 : i32, i32
  }
  func.func @transform_5(%arg0: i32) -> (i32, i32) {
    %c0_i32 = arith.constant 0 : i32
    %c0_i32_0 = arith.constant 0 : i32
    %c0_i32_1 = arith.constant 0 : i32
    return %c0_i32, %c0_i32_0 : i32, i32
  }
  func.func @transform_6(%arg0: i32) -> (i32, i32) {
    %c0_i32 = arith.constant 0 : i32
    %c0_i32_0 = arith.constant 0 : i32
    return %arg0, %c0_i32 : i32, i32
  }
}

</mosaic_0001>

<llo_original>
// kernel: tpu_custom_call.1
$region0: #{tpu_custom_call.1}
  #allocation0 [shape = 'u32[]', space=smem, size = 0x4, offset = 0x4, fixed_abs, tag = 'smem constant byte address 0x4 - core index']
  #allocation1 [shape = 'u32[144,128]{1,0:T(1,128)}', space=vmem, size = 0x12000, scoped, tag = 'internal scratch']
  %s0 = inlined_call_operand.vmem [shape: f32[16,280], index: 0, kind: input, shape index: {}]
  %s1 = inlined_call_operand.vmem [shape: bf16[280,32], index: 1, kind: input, shape index: {}]
  %s2 = inlined_call_operand.vmem [shape: bf16[8,32,32], index: 2, kind: input, shape index: {}]
  %s3 = inlined_call_operand.vmem [shape: f32[9,32], index: 3, kind: input, shape index: {}]
  %s4 = inlined_call_operand.hbm [shape: bf16[32,128], index: 4, kind: input, shape index: {}]
  %s5 = inlined_call_operand.vmem [shape: f32[1,128], index: 5, kind: input, shape index: {}]
  %s6 = inlined_call_operand.hbm [shape: f32[16,128], index: 6, kind: output, shape index: {}]
  %s7 = sld [smem:[#allocation0]]
  $region38: #{tpu_custom_call.1} parent=0
    _
  %s9 = ssub.s32 1, %s7
  %s10 = scalar_select 0, %s9, %s7
  $region1: #{tpu_custom_call.1} parent=0
    #allocation2 [shape = 'u8[8192]{0}', space=vmem, size = 0x2000, scoped, tag = 'input window, operand 4, single buffered']
    #allocation3 [shape = 's32[1]{0}', space=sflag, size = 0x4, scoped, tag = 'scoped memory for tpu_custom_call.1']
    #allocation4 [shape = 's32[1]{0}', space=sflag, size = 0x4, scoped, tag = 'scoped memory for tpu_custom_call.1']
    #allocation5 [shape = 'u8[8192]{0}', space=vmem, size = 0x2000, scoped, tag = 'output window, operand 0, single buffered']
    %11 = vsyncpa [#allocation3], 0
    %12 = vsyncpa [#allocation4], 0
    // Predicated region
    $region2: #{tpu_custom_call.1} parent=1 // pred_check
      _
    $region3: #{tpu_custom_call.1} parent=1 // pred_check_branch
      %14 = sbr.rel (0) target = $region5
    $region4: #{tpu_custom_call.1} parent=1 // pred_region
      _
    $region5: #{tpu_custom_call.1} parent=1 // pred_fallthru
      _
    // Predicated region
    $region6: #{tpu_custom_call.1} parent=1 // pred_check
      _
    $region7: #{tpu_custom_call.1} parent=1 // pred_check_branch
      %16 = sbr.rel (0) target = $region9
    $region8: #{tpu_custom_call.1} parent=1 // pred_region
      _
    $region9: #{tpu_custom_call.1} parent=1 // pred_fallthru
      _
    // Predicated region
    $region10: #{tpu_custom_call.1} parent=1 // pred_check
      _
    $region11: #{tpu_custom_call.1} parent=1 // pred_check_branch
      %18 = sbr.rel (0) target = $region13
    $region12: #{tpu_custom_call.1} parent=1 // pred_region
      _
    $region13: #{tpu_custom_call.1} parent=1 // pred_fallthru
      _
    // Predicated region
    $region14: #{tpu_custom_call.1} parent=1 // pred_check
      _
    $region15: #{tpu_custom_call.1} parent=1 // pred_check_branch
      %20 = sbr.rel (0) target = $region17
    $region16: #{tpu_custom_call.1} parent=1 // pred_region
      _
    $region17: #{tpu_custom_call.1} parent=1 // pred_fallthru
      _
    // Predicated region
    $region18: #{tpu_custom_call.1} parent=1 // pred_check
      _
    $region19: #{tpu_custom_call.1} parent=1 // pred_check_branch
      %22 = sbr.rel (0) target = $region21
    $region20: #{tpu_custom_call.1} parent=1 // pred_region
      %s24 = ssub.s32 256, 256
      %25 = vsyncadd [#allocation3], %s24
      %s26 = sshll.u32 [#allocation2], 4
      %s27 = int_to_ptr.vmem [resolvable:$true] %s26
      %32 = dma.hbm_to_vmem [thread:$0]  %s4, 256, %s27, [#allocation3], 64, 64, 4
    $region21: #{tpu_custom_call.1} parent=1 // pred_fallthru
      _
    // Predicated region
    $region22: #{tpu_custom_call.1} parent=1 // pred_check
      _
    $region23: #{tpu_custom_call.1} parent=1 // pred_check_branch
      %34 = sbr.rel (0) target = $region25
    $region24: #{tpu_custom_call.1} parent=1 // pred_region
      _
    $region25: #{tpu_custom_call.1} parent=1 // pred_fallthru
      _
    // Predicated region
    $region26: #{tpu_custom_call.1} parent=1 // pred_check
      _
    $region27: #{tpu_custom_call.1} parent=1 // pred_check_branch
      %36 = sbr.rel (0) target = $region29
    $region28: #{tpu_custom_call.1} parent=1 // pred_region
      %37 = dma.done [#allocation3], 256
    $region29: #{tpu_custom_call.1} parent=1 // pred_fallthru
      _
    %v40 = vld [vmem:[%s0] sm:$0xff]
    %v41 = vld [vmem:[%s0 + $0x8] sm:$0xff]
    %v42 = vld [vmem:[%s0 + $0x10] sm:$0xff]
    %v43 = vld [vmem:[%s0 + $0x18] sm:$0xff]
    %v44 = vld [vmem:[%s0 + $0x20] sm:$0xff]
    %v45 = vld [vmem:[%s0 + $0x28] sm:$0xff]
    %v46 = vld [vmem:[%s1] sm:$0xf]
    %v47 = vld [vmem:[%s1 + $0x4] sm:$0xf]
    %v48 = vld [vmem:[%s1 + $0x8] sm:$0xf]
    %v49 = vld [vmem:[%s1 + $0xc] sm:$0xf]
    %v50 = vld [vmem:[%s1 + $0x10] sm:$0xf]
    %v51 = vld [vmem:[%s1 + $0x14] sm:$0xf]
    %v52 = vld [vmem:[%s1 + $0x18] sm:$0xf]
    %v53 = vld [vmem:[%s1 + $0x1c] sm:$0xf]
    %v54 = vld [vmem:[%s1 + $0x20] sm:$0xf]
    %v55 = vld [vmem:[%s1 + $0x24] sm:$0xf]
    %v56 = vld [vmem:[%s1 + $0x28] sm:$0xf]
    %v57 = vld [vmem:[%s1 + $0x2c] sm:$0xf]
    %v58 = vld [vmem:[%s1 + $0x30] sm:$0xf]
    %v59 = vld [vmem:[%s1 + $0x34] sm:$0xf]
    %v60 = vld [vmem:[%s1 + $0x38] sm:$0xf]
    %v61 = vld [vmem:[%s1 + $0x3c] sm:$0xf]
    %v62 = vld [vmem:[%s1 + $0x40] sm:$0xf]
    %v63 = vld [vmem:[%s1 + $0x44] sm:$0xf]
    %v64 = vld [vmem:[%s1 + $0x48] sm:$0xf]
    %v65 = vld [vmem:[%s1 + $0x4c] sm:$0xf]
    %v66 = vld [vmem:[%s1 + $0x50] sm:$0xf]
    %v67 = vld [vmem:[%s1 + $0x54] sm:$0xf]
    %v68 = vld [vmem:[%s1 + $0x58] sm:$0xf]
    %v69 = vld [vmem:[%s1 + $0x5c] sm:$0xf]
    %v70 = vld [vmem:[%s1 + $0x60] sm:$0xf]
    %v71 = vld [vmem:[%s1 + $0x64] sm:$0xf]
    %v72 = vld [vmem:[%s1 + $0x68] sm:$0xf]
    %v73 = vld [vmem:[%s1 + $0x6c] sm:$0xf]
    %v74 = vld [vmem:[%s1 + $0x70] sm:$0xf]
    %v75 = vld [vmem:[%s1 + $0x74] sm:$0xf]
    %v76 = vld [vmem:[%s1 + $0x78] sm:$0xf]
    %v77 = vld [vmem:[%s1 + $0x7c] sm:$0xf]
    %v78 = vld [vmem:[%s1 + $0x80] sm:$0xf]
    %v79 = vld [vmem:[%s1 + $0x84] sm:$0xf]
    %v80 = vld [vmem:[%s1 + $0x88] sm:$0xf]
    %v81 = vpack.c.bf16 %v43, %v40
    %v82 = vpack.c.bf16 %v44, %v41
    %v83 = vpack.c.bf16 %v45, %v42
    %v84 = vld [vmem:[%s3] sm:$0x1]
    %v85 = vlaneseq
    %v86 = vshrl.u32 %v85, 7
    %v87 = vsub.s32 0, %v86
    %v88 = vrot.slane %v84, %v87
    %v124 = vunpack.c.l.b16 %v46
    %v125 = vunpack.c.l.b16 %v47
    %v126 = vunpack.c.l.b16 %v48
    %v127 = vunpack.c.l.b16 %v49
    %v128 = vunpack.c.l.b16 %v50
    %v129 = vunpack.c.l.b16 %v51
    %v130 = vunpack.c.l.b16 %v52
    %v131 = vunpack.c.l.b16 %v53
    %v132 = vunpack.c.l.b16 %v54
    %v133 = vunpack.c.l.b16 %v55
    %v134 = vunpack.c.l.b16 %v56
    %v135 = vunpack.c.l.b16 %v57
    %v136 = vunpack.c.l.b16 %v58
    %v137 = vunpack.c.l.b16 %v59
    %v138 = vunpack.c.l.b16 %v60
    %v139 = vunpack.c.l.b16 %v61
    %v140 = vunpack.c.l.b16 %v62
    %v141 = vunpack.c.l.b16 %v63
    %v142 = vunpack.c.l.b16 %v64
    %v143 = vunpack.c.l.b16 %v65
    %v144 = vunpack.c.l.b16 %v66
    %v145 = vunpack.c.l.b16 %v67
    %v146 = vunpack.c.l.b16 %v68
    %v147 = vunpack.c.l.b16 %v69
    %v148 = vunpack.c.l.b16 %v70
    %v149 = vunpack.c.l.b16 %v71
    %v150 = vunpack.c.l.b16 %v72
    %v151 = vunpack.c.l.b16 %v73
    %v152 = vunpack.c.l.b16 %v74
    %v153 = vunpack.c.l.b16 %v75
    %v154 = vunpack.c.l.b16 %v76
    %v155 = vunpack.c.l.b16 %v77
    %v156 = vunpack.c.l.b16 %v78
    %v157 = vunpack.c.l.b16 %v79
    %v158 = vunpack.c.l.b16 %v80
    %v159 = vpack.c.b16 %v125, %v124
    %v160 = vpack.c.b16 %v127, %v126
    %v161 = vpack.c.b16 %v129, %v128
    %v162 = vpack.c.b16 %v131, %v130
    %v163 = vpack.c.b16 %v133, %v132
    %v164 = vpack.c.b16 %v135, %v134
    %v165 = vpack.c.b16 %v137, %v136
    %v166 = vpack.c.b16 %v139, %v138
    %v167 = vpack.c.b16 %v141, %v140
    %v168 = vpack.c.b16 %v143, %v142
    %v169 = vpack.c.b16 %v145, %v144
    %v170 = vpack.c.b16 %v147, %v146
    %v171 = vpack.c.b16 %v149, %v148
    %v172 = vpack.c.b16 %v151, %v150
    %v173 = vpack.c.b16 %v153, %v152
    %v174 = vpack.c.b16 %v155, %v154
    %v175 = vpack.c.b16 %v157, %v156
    %v176 = vpack.c.b16 %v158, %v158
    %vm194 = vcmask 195584
    %v196 = vsel %vm194, %v83, 0
    %vm198 = vcmask 1043456
    %v200 = vsel %vm198, %v176, 0
    %202 = vmatprep.subr.bf16.mxu0 0
    %203 = vmatpush1.bf16.msra.mxu0 %v159
    %204 = vmatprep.subr.bf16.mxu0 0
    %205 = vmatpush1.bf16.msra.mxu0 %v160
    %206 = vmatprep.subr.bf16.mxu0 0
    %207 = vmatpush1.bf16.msra.mxu0 %v161
    %208 = vmatprep.subr.bf16.mxu0 0
    %209 = vmatpush1.bf16.msra.mxu0 %v162
    %210 = vmatprep.subr.bf16.mxu0 0
    %211 = vmatpush1.bf16.msra.mxu0 %v163
    %212 = vmatprep.subr.bf16.mxu0 0
    %213 = vmatpush1.bf16.msra.mxu0 %v164
    %214 = vmatprep.subr.bf16.mxu0 0
    %215 = vmatpush1.bf16.msra.mxu0 %v165
    %216 = vmatprep.subr.bf16.mxu0 0
    %217 = vmatpush1.bf16.msra.mxu0 %v166
    %218 = vmatprep.subr.bf16.mxu0 0
    %219 = vmatpush1.bf16.msra.mxu0 %v167
    %220 = vmatprep.subr.bf16.mxu0 0
    %221 = vmatpush1.bf16.msra.mxu0 %v168
    %222 = vmatprep.subr.bf16.mxu0 0
    %223 = vmatpush1.bf16.msra.mxu0 %v169
    %224 = vmatprep.subr.bf16.mxu0 0
    %225 = vmatpush1.bf16.msra.mxu0 %v170
    %226 = vmatprep.subr.bf16.mxu0 0
    %227 = vmatpush1.bf16.msra.mxu0 %v171
    %228 = vmatprep.subr.bf16.mxu0 0
    %229 = vmatpush1.bf16.msra.mxu0 %v172
    %230 = vmatprep.subr.bf16.mxu0 0
    %231 = vmatpush1.bf16.msra.mxu0 %v173
    %232 = vmatprep.subr.bf16.mxu0 0
    %233 = vmatpush1.bf16.msra.mxu0 %v174
    %234 = vmatprep.mubr.bf16.mxu0 %v82
    %235 = vmatmul.mubr.bf16.gmra.mrb[0].mxu0 %v81
    %v236 = vpop.f32.mrb[0].mxu0
    %v237 = vadd.f32 %v88, %v236
    %v238 = vpop.f32.mrb[0].mxu0
    %v239 = vpop.f32.mrb[0].mxu0
    %v240 = vadd.f32 %v88, %v239
    %v241 = vpop.f32.mrb[0].mxu0
    %242 = vdwg.mxu0
    %243 = vmatprep.subr.bf16.mxu0 0
    %244 = vmatpush1.bf16.msra.mxu0 %v175
    %245 = vmatprep.subr.bf16.mxu0 0
    %246 = vmatpush1.bf16.msra.mxu0 %v200
    %247 = vmatprep.subr.bf16.mxu0 0
    %248 = vmatpush1.bf16.msra.mxu0 0
    %249 = vmatprep.subr.bf16.mxu0 0
    %250 = vmatpush1.bf16.msra.mxu0 0
    %251 = vmatprep.subr.bf16.mxu0 0
    %252 = vmatpush1.bf16.msra.mxu0 0
    %253 = vmatprep.subr.bf16.mxu0 0
    %254 = vmatpush1.bf16.msra.mxu0 0
    %255 = vmatprep.subr.bf16.mxu0 0
    %256 = vmatpush1.bf16.msra.mxu0 0
    %257 = vmatprep.subr.bf16.mxu0 0
    %258 = vmatpush1.bf16.msra.mxu0 0
    %259 = vmatprep.subr.bf16.mxu0 0
    %260 = vmatpush1.bf16.msra.mxu0 0
    %261 = vmatprep.subr.bf16.mxu0 0
    %262 = vmatpush1.bf16.msra.mxu0 0
    %263 = vmatprep.subr.bf16.mxu0 0
    %264 = vmatpush1.bf16.msra.mxu0 0
    %265 = vmatprep.subr.bf16.mxu0 0
    %266 = vmatpush1.bf16.msra.mxu0 0
    %267 = vmatprep.subr.bf16.mxu0 0
    %268 = vmatpush1.bf16.msra.mxu0 0
    %269 = vmatprep.subr.bf16.mxu0 0
    %270 = vmatpush1.bf16.msra.mxu0 0
    %271 = vmatprep.subr.bf16.mxu0 0
    %272 = vmatpush1.bf16.msra.mxu0 0
    %273 = vmatprep.subr.bf16.mxu0 0
    %274 = vmatpush1.bf16.msra.mxu0 0
    %275 = vmatprep.mubr.bf16.mxu0 0
    %276 = vmatmul.mubr.bf16.gmra.mrb[0].mxu0 %v196
    %v277 = vpop.f32.mrb[0].mxu0
    %v278 = vadd.f32 %v237, %v277
    %v279 = vpop.f32.mrb[0].mxu0
    %v280 = vpop.f32.mrb[0].mxu0
    %v281 = vadd.f32 %v240, %v280
    %v282 = vpop.f32.mrb[0].mxu0
    %283 = vdwg.mxu0
    %v284 = vpack.c.bf16 %v281, %v278
    %vm285 = vcmp.gt.bf16.partialorder %v284, 0
    %v286 = vmul.bf16 %v284, 1009007652
    %v287 = vsel %vm285, %v284, %v286
    %v288 = vld [vmem:[%s2] sm:$0xf]
    %v289 = vld [vmem:[%s2 + $0x4] sm:$0xf]
    %v290 = vld [vmem:[%s2 + $0x8] sm:$0xf]
    %v291 = vld [vmem:[%s2 + $0xc] sm:$0xf]
    %v292 = vld [vmem:[%s3 + $0x1] sm:$0x1]
    %v293 = vlaneseq
    %v294 = vshrl.u32 %v293, 7
    %v295 = vsub.s32 0, %v294
    %v296 = vrot.slane %v292, %v295
    %v301 = vunpack.c.l.b16 %v288
    %v302 = vunpack.c.l.b16 %v289
    %v303 = vunpack.c.l.b16 %v290
    %v304 = vunpack.c.l.b16 %v291
    %v305 = vpack.c.b16 %v302, %v301
    %v306 = vpack.c.b16 %v304, %v303
    %vm309 = vcmask 261120
    %v311 = vsel %vm309, %v287, 0
    %313 = vmatprep.subr.bf16.mxu0 0
    %314 = vmatpush1.bf16.msra.mxu0 %v305
    %315 = vmatprep.subr.bf16.mxu0 0
    %316 = vmatpush1.bf16.msra.mxu0 %v306
    %317 = vmatprep.subr.bf16.mxu0 0
    %318 = vmatpush1.bf16.msra.mxu0 0
    %319 = vmatprep.subr.bf16.mxu0 0
    %320 = vmatpush1.bf16.msra.mxu0 0
    %321 = vmatprep.subr.bf16.mxu0 0
    %322 = vmatpush1.bf16.msra.mxu0 0
    %323 = vmatprep.subr.bf16.mxu0 0
    %324 = vmatpush1.bf16.msra.mxu0 0
    %325 = vmatprep.subr.bf16.mxu0 0
    %326 = vmatpush1.bf16.msra.mxu0 0
    %327 = vmatprep.subr.bf16.mxu0 0
    %328 = vmatpush1.bf16.msra.mxu0 0
    %329 = vmatprep.subr.bf16.mxu0 0
    %330 = vmatpush1.bf16.msra.mxu0 0
    %331 = vmatprep.subr.bf16.mxu0 0
    %332 = vmatpush1.bf16.msra.mxu0 0
    %333 = vmatprep.subr.bf16.mxu0 0
    %334 = vmatpush1.bf16.msra.mxu0 0
    %335 = vmatprep.subr.bf16.mxu0 0
    %336 = vmatpush1.bf16.msra.mxu0 0
    %337 = vmatprep.subr.bf16.mxu0 0
    %338 = vmatpush1.bf16.msra.mxu0 0
    %339 = vmatprep.subr.bf16.mxu0 0
    %340 = vmatpush1.bf16.msra.mxu0 0
    %341 = vmatprep.subr.bf16.mxu0 0
    %342 = vmatpush1.bf16.msra.mxu0 0
    %343 = vmatprep.subr.bf16.mxu0 0
    %344 = vmatpush1.bf16.msra.mxu0 0
    %345 = vmatprep.mubr.bf16.mxu0 0
    %346 = vmatmul.mubr.bf16.gmra.mrb[0].mxu0 %v311
    %v347 = vpop.f32.mrb[0].mxu0
    %v348 = vadd.f32 %v296, %v347
    %v349 = vpop.f32.mrb[0].mxu0
    %v350 = vpop.f32.mrb[0].mxu0
    %v351 = vadd.f32 %v296, %v350
    %v352 = vpop.f32.mrb[0].mxu0
    %353 = vdwg.mxu0
    %v354 = vpack.c.bf16 %v351, %v348
    %vm355 = vcmp.gt.bf16.partialorder %v354, 0
    %v356 = vmul.bf16 %v354, 1009007652
    %v357 = vsel %vm355, %v354, %v356
    %s358 = scalar_lea.vmem %s2, 16
    %v359 = vld [vmem:[%s358] sm:$0xf]
    %v360 = vld [vmem:[%s358 + $0x4] sm:$0xf]
    %v361 = vld [vmem:[%s358 + $0x8] sm:$0xf]
    %v362 = vld [vmem:[%s358 + $0xc] sm:$0xf]
    %v363 = vld [vmem:[%s3 + $0x2] sm:$0x1]
    %v364 = vlaneseq
    %v365 = vshrl.u32 %v364, 7
    %v366 = vsub.s32 0, %v365
    %v367 = vrot.slane %v363, %v366
    %v372 = vunpack.c.l.b16 %v359
    %v373 = vunpack.c.l.b16 %v360
    %v374 = vunpack.c.l.b16 %v361
    %v375 = vunpack.c.l.b16 %v362
    %v376 = vpack.c.b16 %v373, %v372
    %v377 = vpack.c.b16 %v375, %v374
    %v381 = vsel %vm309, %v357, 0
    %383 = vmatprep.subr.bf16.mxu0 0
    %384 = vmatpush1.bf16.msra.mxu0 %v376
    %385 = vmatprep.subr.bf16.mxu0 0
    %386 = vmatpush1.bf16.msra.mxu0 %v377
    %387 = vmatprep.subr.bf16.mxu0 0
    %388 = vmatpush1.bf16.msra.mxu0 0
    %389 = vmatprep.subr.bf16.mxu0 0
    %390 = vmatpush1.bf16.msra.mxu0 0
    %391 = vmatprep.subr.bf16.mxu0 0
    %392 = vmatpush1.bf16.msra.mxu0 0
    %393 = vmatprep.subr.bf16.mxu0 0
    %394 = vmatpush1.bf16.msra.mxu0 0
    %395 = vmatprep.subr.bf16.mxu0 0
    %396 = vmatpush1.bf16.msra.mxu0 0
    %397 = vmatprep.subr.bf16.mxu0 0
    %398 = vmatpush1.bf16.msra.mxu0 0
    %399 = vmatprep.subr.bf16.mxu0 0
    %400 = vmatpush1.bf16.msra.mxu0 0
    %401 = vmatprep.subr.bf16.mxu0 0
    %402 = vmatpush1.bf16.msra.mxu0 0
    %403 = vmatprep.subr.bf16.mxu0 0
    %404 = vmatpush1.bf16.msra.mxu0 0
    %405 = vmatprep.subr.bf16.mxu0 0
    %406 = vmatpush1.bf16.msra.mxu0 0
    %407 = vmatprep.subr.bf16.mxu0 0
    %408 = vmatpush1.bf16.msra.mxu0 0
    %409 = vmatprep.subr.bf16.mxu0 0
    %410 = vmatpush1.bf16.msra.mxu0 0
    %411 = vmatprep.subr.bf16.mxu0 0
    %412 = vmatpush1.bf16.msra.mxu0 0
    %413 = vmatprep.subr.bf16.mxu0 0
    %414 = vmatpush1.bf16.msra.mxu0 0
    %415 = vmatprep.mubr.bf16.mxu0 0
    %416 = vmatmul.mubr.bf16.gmra.mrb[0].mxu0 %v381
    %v417 = vpop.f32.mrb[0].mxu0
    %v418 = vadd.f32 %v367, %v417
    %v419 = vpop.f32.mrb[0].mxu0
    %v420 = vpop.f32.mrb[0].mxu0
    %v421 = vadd.f32 %v367, %v420
    %v422 = vpop.f32.mrb[0].mxu0
    %423 = vdwg.mxu0
    %v424 = vpack.c.bf16 %v421, %v418
    %v425 = vadd.bf16 %v424, %v287
    %vm426 = vcmp.gt.bf16.partialorder %v425, 0
    %v427 = vmul.bf16 %v425, 1009007652
    %v428 = vsel %vm426, %v425, %v427
    %s429 = scalar_lea.vmem %s2, 32
    %v430 = vld [vmem:[%s429] sm:$0xf]
    %v431 = vld [vmem:[%s429 + $0x4] sm:$0xf]
    %v432 = vld [vmem:[%s429 + $0x8] sm:$0xf]
    %v433 = vld [vmem:[%s429 + $0xc] sm:$0xf]
    %v434 = vld [vmem:[%s3 + $0x3] sm:$0x1]
    %v435 = vlaneseq
    %v436 = vshrl.u32 %v435, 7
    %v437 = vsub.s32 0, %v436
    %v438 = vrot.slane %v434, %v437
    %v443 = vunpack.c.l.b16 %v430
    %v444 = vunpack.c.l.b16 %v431
    %v445 = vunpack.c.l.b16 %v432
    %v446 = vunpack.c.l.b16 %v433
    %v447 = vpack.c.b16 %v444, %v443
    %v448 = vpack.c.b16 %v446, %v445
    %v452 = vsel %vm309, %v428, 0
    %454 = vmatprep.subr.bf16.mxu0 0
    %455 = vmatpush1.bf16.msra.mxu0 %v447
    %456 = vmatprep.subr.bf16.mxu0 0
    %457 = vmatpush1.bf16.msra.mxu0 %v448
    %458 = vmatprep.subr.bf16.mxu0 0
    %459 = vmatpush1.bf16.msra.mxu0 0
    %460 = vmatprep.subr.bf16.mxu0 0
    %461 = vmatpush1.bf16.msra.mxu0 0
    %462 = vmatprep.subr.bf16.mxu0 0
    %463 = vmatpush1.bf16.msra.mxu0 0
    %464 = vmatprep.subr.bf16.mxu0 0
    %465 = vmatpush1.bf16.msra.mxu0 0
    %466 = vmatprep.subr.bf16.mxu0 0
    %467 = vmatpush1.bf16.msra.mxu0 0
    %468 = vmatprep.subr.bf16.mxu0 0
    %469 = vmatpush1.bf16.msra.mxu0 0
    %470 = vmatprep.subr.bf16.mxu0 0
    %471 = vmatpush1.bf16.msra.mxu0 0
    %472 = vmatprep.subr.bf16.mxu0 0
    %473 = vmatpush1.bf16.msra.mxu0 0
    %474 = vmatprep.subr.bf16.mxu0 0
    %475 = vmatpush1.bf16.msra.mxu0 0
    %476 = vmatprep.subr.bf16.mxu0 0
    %477 = vmatpush1.bf16.msra.mxu0 0
    %478 = vmatprep.subr.bf16.mxu0 0
    %479 = vmatpush1.bf16.msra.mxu0 0
    %480 = vmatprep.subr.bf16.mxu0 0
    %481 = vmatpush1.bf16.msra.mxu0 0
    %482 = vmatprep.subr.bf16.mxu0 0
    %483 = vmatpush1.bf16.msra.mxu0 0
    %484 = vmatprep.subr.bf16.mxu0 0
    %485 = vmatpush1.bf16.msra.mxu0 0
    %486 = vmatprep.mubr.bf16.mxu0 0
    %487 = vmatmul.mubr.bf16.gmra.mrb[0].mxu0 %v452
    %v488 = vpop.f32.mrb[0].mxu0
    %v489 = vadd.f32 %v438, %v488
    %v490 = vpop.f32.mrb[0].mxu0
    %v491 = vpop.f32.mrb[0].mxu0
    %v492 = vadd.f32 %v438, %v491
    %v493 = vpop.f32.mrb[0].mxu0
    %494 = vdwg.mxu0
    %v495 = vpack.c.bf16 %v492, %v489
    %vm496 = vcmp.gt.bf16.partialorder %v495, 0
    %v497 = vmul.bf16 %v495, 1009007652
    %v498 = vsel %vm496, %v495, %v497
    %s499 = scalar_lea.vmem %s2, 48
    %v500 = vld [vmem:[%s499] sm:$0xf]
    %v501 = vld [vmem:[%s499 + $0x4] sm:$0xf]
    %v502 = vld [vmem:[%s499 + $0x8] sm:$0xf]
    %v503 = vld [vmem:[%s499 + $0xc] sm:$0xf]
    %v504 = vld [vmem:[%s3 + $0x4] sm:$0x1]
    %v505 = vlaneseq
    %v506 = vshrl.u32 %v505, 7
    %v507 = vsub.s32 0, %v506
    %v508 = vrot.slane %v504, %v507
    %v513 = vunpack.c.l.b16 %v500
    %v514 = vunpack.c.l.b16 %v501
    %v515 = vunpack.c.l.b16 %v502
    %v516 = vunpack.c.l.b16 %v503
    %v517 = vpack.c.b16 %v514, %v513
    %v518 = vpack.c.b16 %v516, %v515
    %v522 = vsel %vm309, %v498, 0
    %524 = vmatprep.subr.bf16.mxu0 0
    %525 = vmatpush1.bf16.msra.mxu0 %v517
    %526 = vmatprep.subr.bf16.mxu0 0
    %527 = vmatpush1.bf16.msra.mxu0 %v518
    %528 = vmatprep.subr.bf16.mxu0 0
    %529 = vmatpush1.bf16.msra.mxu0 0
    %530 = vmatprep.subr.bf16.mxu0 0
    %531 = vmatpush1.bf16.msra.mxu0 0
    %532 = vmatprep.subr.bf16.mxu0 0
    %533 = vmatpush1.bf16.msra.mxu0 0
    %534 = vmatprep.subr.bf16.mxu0 0
    %535 = vmatpush1.bf16.msra.mxu0 0
    %536 = vmatprep.subr.bf16.mxu0 0
    %537 = vmatpush1.bf16.msra.mxu0 0
    %538 = vmatprep.subr.bf16.mxu0 0
    %539 = vmatpush1.bf16.msra.mxu0 0
    %540 = vmatprep.subr.bf16.mxu0 0
    %541 = vmatpush1.bf16.msra.mxu0 0
    %542 = vmatprep.subr.bf16.mxu0 0
    %543 = vmatpush1.bf16.msra.mxu0 0
    %544 = vmatprep.subr.bf16.mxu0 0
    %545 = vmatpush1.bf16.msra.mxu0 0
    %546 = vmatprep.subr.bf16.mxu0 0
    %547 = vmatpush1.bf16.msra.mxu0 0
    %548 = vmatprep.subr.bf16.mxu0 0
    %549 = vmatpush1.bf16.msra.mxu0 0
    %550 = vmatprep.subr.bf16.mxu0 0
    %551 = vmatpush1.bf16.msra.mxu0 0
    %552 = vmatprep.subr.bf16.mxu0 0
    %553 = vmatpush1.bf16.msra.mxu0 0
    %554 = vmatprep.subr.bf16.mxu0 0
    %555 = vmatpush1.bf16.msra.mxu0 0
    %556 = vmatprep.mubr.bf16.mxu0 0
    %557 = vmatmul.mubr.bf16.gmra.mrb[0].mxu0 %v522
    %v558 = vpop.f32.mrb[0].mxu0
    %v559 = vadd.f32 %v508, %v558
    %v560 = vpop.f32.mrb[0].mxu0
    %v561 = vpop.f32.mrb[0].mxu0
    %v562 = vadd.f32 %v508, %v561
    %v563 = vpop.f32.mrb[0].mxu0
    %564 = vdwg.mxu0
    %v565 = vpack.c.bf16 %v562, %v559
    %v566 = vadd.bf16 %v565, %v428
    %vm567 = vcmp.gt.bf16.partialorder %v566, 0
    %v568 = vmul.bf16 %v566, 1009007652
    %v569 = vsel %vm567, %v566, %v568
    %s570 = scalar_lea.vmem %s2, 64
    %v571 = vld [vmem:[%s570] sm:$0xf]
    %v572 = vld [vmem:[%s570 + $0x4] sm:$0xf]
    %v573 = vld [vmem:[%s570 + $0x8] sm:$0xf]
    %v574 = vld [vmem:[%s570 + $0xc] sm:$0xf]
    %v575 = vld [vmem:[%s3 + $0x5] sm:$0x1]
    %v576 = vlaneseq
    %v577 = vshrl.u32 %v576, 7
    %v578 = vsub.s32 0, %v577
    %v579 = vrot.slane %v575, %v578
    %v584 = vunpack.c.l.b16 %v571
    %v585 = vunpack.c.l.b16 %v572
    %v586 = vunpack.c.l.b16 %v573
    %v587 = vunpack.c.l.b16 %v574
    %v588 = vpack.c.b16 %v585, %v584
    %v589 = vpack.c.b16 %v587, %v586
    %v593 = vsel %vm309, %v569, 0
    %595 = vmatprep.subr.bf16.mxu0 0
    %596 = vmatpush1.bf16.msra.mxu0 %v588
    %597 = vmatprep.subr.bf16.mxu0 0
    %598 = vmatpush1.bf16.msra.mxu0 %v589
    %599 = vmatprep.subr.bf16.mxu0 0
    %600 = vmatpush1.bf16.msra.mxu0 0
    %601 = vmatprep.subr.bf16.mxu0 0
    %602 = vmatpush1.bf16.msra.mxu0 0
    %603 = vmatprep.subr.bf16.mxu0 0
    %604 = vmatpush1.bf16.msra.mxu0 0
    %605 = vmatprep.subr.bf16.mxu0 0
    %606 = vmatpush1.bf16.msra.mxu0 0
    %607 = vmatprep.subr.bf16.mxu0 0
    %608 = vmatpush1.bf16.msra.mxu0 0
    %609 = vmatprep.subr.bf16.mxu0 0
    %610 = vmatpush1.bf16.msra.mxu0 0
    %611 = vmatprep.subr.bf16.mxu0 0
    %612 = vmatpush1.bf16.msra.mxu0 0
    %613 = vmatprep.subr.bf16.mxu0 0
    %614 = vmatpush1.bf16.msra.mxu0 0
    %615 = vmatprep.subr.bf16.mxu0 0
    %616 = vmatpush1.bf16.msra.mxu0 0
    %617 = vmatprep.subr.bf16.mxu0 0
    %618 = vmatpush1.bf16.msra.mxu0 0
    %619 = vmatprep.subr.bf16.mxu0 0
    %620 = vmatpush1.bf16.msra.mxu0 0
    %621 = vmatprep.subr.bf16.mxu0 0
    %622 = vmatpush1.bf16.msra.mxu0 0
    %623 = vmatprep.subr.bf16.mxu0 0
    %624 = vmatpush1.bf16.msra.mxu0 0
    %625 = vmatprep.subr.bf16.mxu0 0
    %626 = vmatpush1.bf16.msra.mxu0 0
    %627 = vmatprep.mubr.bf16.mxu0 0
    %628 = vmatmul.mubr.bf16.gmra.mrb[0].mxu0 %v593
    %v629 = vpop.f32.mrb[0].mxu0
    %v630 = vadd.f32 %v579, %v629
    %v631 = vpop.f32.mrb[0].mxu0
    %v632 = vpop.f32.mrb[0].mxu0
    %v633 = vadd.f32 %v579, %v632
    %v634 = vpop.f32.mrb[0].mxu0
    %635 = vdwg.mxu0
    %v636 = vpack.c.bf16 %v633, %v630
    %vm637 = vcmp.gt.bf16.partialorder %v636, 0
    %v638 = vmul.bf16 %v636, 1009007652
    %v639 = vsel %vm637, %v636, %v638
    %s640 = scalar_lea.vmem %s2, 80
    %v641 = vld [vmem:[%s640] sm:$0xf]
    %v642 = vld [vmem:[%s640 + $0x4] sm:$0xf]
    %v643 = vld [vmem:[%s640 + $0x8] sm:$0xf]
    %v644 = vld [vmem:[%s640 + $0xc] sm:$0xf]
    %v645 = vld [vmem:[%s3 + $0x6] sm:$0x1]
    %v646 = vlaneseq
    %v647 = vshrl.u32 %v646, 7
    %v648 = vsub.s32 0, %v647
    %v649 = vrot.slane %v645, %v648
    %v654 = vunpack.c.l.b16 %v641
    %v655 = vunpack.c.l.b16 %v642
    %v656 = vunpack.c.l.b16 %v643
    %v657 = vunpack.c.l.b16 %v644
    %v658 = vpack.c.b16 %v655, %v654
    %v659 = vpack.c.b16 %v657, %v656
    %v663 = vsel %vm309, %v639, 0
    %665 = vmatprep.subr.bf16.mxu0 0
    %666 = vmatpush1.bf16.msra.mxu0 %v658
    %667 = vmatprep.subr.bf16.mxu0 0
    %668 = vmatpush1.bf16.msra.mxu0 %v659
    %669 = vmatprep.subr.bf16.mxu0 0
    %670 = vmatpush1.bf16.msra.mxu0 0
    %671 = vmatprep.subr.bf16.mxu0 0
    %672 = vmatpush1.bf16.msra.mxu0 0
    %673 = vmatprep.subr.bf16.mxu0 0
    %674 = vmatpush1.bf16.msra.mxu0 0
    %675 = vmatprep.subr.bf16.mxu0 0
    %676 = vmatpush1.bf16.msra.mxu0 0
    %677 = vmatprep.subr.bf16.mxu0 0
    %678 = vmatpush1.bf16.msra.mxu0 0
    %679 = vmatprep.subr.bf16.mxu0 0
    %680 = vmatpush1.bf16.msra.mxu0 0
    %681 = vmatprep.subr.bf16.mxu0 0
    %682 = vmatpush1.bf16.msra.mxu0 0
    %683 = vmatprep.subr.bf16.mxu0 0
    %684 = vmatpush1.bf16.msra.mxu0 0
    %685 = vmatprep.subr.bf16.mxu0 0
    %686 = vmatpush1.bf16.msra.mxu0 0
    %687 = vmatprep.subr.bf16.mxu0 0
    %688 = vmatpush1.bf16.msra.mxu0 0
    %689 = vmatprep.subr.bf16.mxu0 0
    %690 = vmatpush1.bf16.msra.mxu0 0
    %691 = vmatprep.subr.bf16.mxu0 0
    %692 = vmatpush1.bf16.msra.mxu0 0
    %693 = vmatprep.subr.bf16.mxu0 0
    %694 = vmatpush1.bf16.msra.mxu0 0
    %695 = vmatprep.subr.bf16.mxu0 0
    %696 = vmatpush1.bf16.msra.mxu0 0
    %697 = vmatprep.mubr.bf16.mxu0 0
    %698 = vmatmul.mubr.bf16.gmra.mrb[0].mxu0 %v663
    %v699 = vpop.f32.mrb[0].mxu0
    %v700 = vadd.f32 %v649, %v699
    %v701 = vpop.f32.mrb[0].mxu0
    %v702 = vpop.f32.mrb[0].mxu0
    %v703 = vadd.f32 %v649, %v702
    %v704 = vpop.f32.mrb[0].mxu0
    %705 = vdwg.mxu0
    %v706 = vpack.c.bf16 %v703, %v700
    %v707 = vadd.bf16 %v706, %v569
    %vm708 = vcmp.gt.bf16.partialorder %v707, 0
    %v709 = vmul.bf16 %v707, 1009007652
    %v710 = vsel %vm708, %v707, %v709
    %s711 = scalar_lea.vmem %s2, 96
    %v712 = vld [vmem:[%s711] sm:$0xf]
    %v713 = vld [vmem:[%s711 + $0x4] sm:$0xf]
    %v714 = vld [vmem:[%s711 + $0x8] sm:$0xf]
    %v715 = vld [vmem:[%s711 + $0xc] sm:$0xf]
    %v716 = vld [vmem:[%s3 + $0x7] sm:$0x1]
    %v717 = vlaneseq
    %v718 = vshrl.u32 %v717, 7
    %v719 = vsub.s32 0, %v718
    %v720 = vrot.slane %v716, %v719
    %v725 = vunpack.c.l.b16 %v712
    %v726 = vunpack.c.l.b16 %v713
    %v727 = vunpack.c.l.b16 %v714
    %v728 = vunpack.c.l.b16 %v715
    %v729 = vpack.c.b16 %v726, %v725
    %v730 = vpack.c.b16 %v728, %v727
    %v734 = vsel %vm309, %v710, 0
    %736 = vmatprep.subr.bf16.mxu0 0
    %737 = vmatpush1.bf16.msra.mxu0 %v729
    %738 = vmatprep.subr.bf16.mxu0 0
    %739 = vmatpush1.bf16.msra.mxu0 %v730
    %740 = vmatprep.subr.bf16.mxu0 0
    %741 = vmatpush1.bf16.msra.mxu0 0
    %742 = vmatprep.subr.bf16.mxu0 0
    %743 = vmatpush1.bf16.msra.mxu0 0
    %744 = vmatprep.subr.bf16.mxu0 0
    %745 = vmatpush1.bf16.msra.mxu0 0
    %746 = vmatprep.subr.bf16.mxu0 0
    %747 = vmatpush1.bf16.msra.mxu0 0
    %748 = vmatprep.subr.bf16.mxu0 0
    %749 = vmatpush1.bf16.msra.mxu0 0
    %750 = vmatprep.subr.bf16.mxu0 0
    %751 = vmatpush1.bf16.msra.mxu0 0
    %752 = vmatprep.subr.bf16.mxu0 0
    %753 = vmatpush1.bf16.msra.mxu0 0
    %754 = vmatprep.subr.bf16.mxu0 0
    %755 = vmatpush1.bf16.msra.mxu0 0
    %756 = vmatprep.subr.bf16.mxu0 0
    %757 = vmatpush1.bf16.msra.mxu0 0
    %758 = vmatprep.subr.bf16.mxu0 0
    %759 = vmatpush1.bf16.msra.mxu0 0
    %760 = vmatprep.subr.bf16.mxu0 0
    %761 = vmatpush1.bf16.msra.mxu0 0
    %762 = vmatprep.subr.bf16.mxu0 0
    %763 = vmatpush1.bf16.msra.mxu0 0
    %764 = vmatprep.subr.bf16.mxu0 0
    %765 = vmatpush1.bf16.msra.mxu0 0
    %766 = vmatprep.subr.bf16.mxu0 0
    %767 = vmatpush1.bf16.msra.mxu0 0
    %768 = vmatprep.mubr.bf16.mxu0 0
    %769 = vmatmul.mubr.bf16.gmra.mrb[0].mxu0 %v734
    %v770 = vpop.f32.mrb[0].mxu0
    %v771 = vadd.f32 %v720, %v770
    %v772 = vpop.f32.mrb[0].mxu0
    %v773 = vpop.f32.mrb[0].mxu0
    %v774 = vadd.f32 %v720, %v773
    %v775 = vpop.f32.mrb[0].mxu0
    %776 = vdwg.mxu0
    %v777 = vpack.c.bf16 %v774, %v771
    %vm778 = vcmp.gt.bf16.partialorder %v777, 0
    %v779 = vmul.bf16 %v777, 1009007652
    %v780 = vsel %vm778, %v777, %v779
    %s781 = scalar_lea.vmem %s2, 112
    %v782 = vld [vmem:[%s781] sm:$0xf]
    %v783 = vld [vmem:[%s781 + $0x4] sm:$0xf]
    %v784 = vld [vmem:[%s781 + $0x8] sm:$0xf]
    %v785 = vld [vmem:[%s781 + $0xc] sm:$0xf]
    %v786 = vld [vmem:[%s3 + $0x8] sm:$0x1]
    %v787 = vlaneseq
    %v788 = vshrl.u32 %v787, 7
    %v789 = vsub.s32 0, %v788
    %v790 = vrot.slane %v786, %v789
    %v795 = vunpack.c.l.b16 %v782
    %v796 = vunpack.c.l.b16 %v783
    %v797 = vunpack.c.l.b16 %v784
    %v798 = vunpack.c.l.b16 %v785
    %v799 = vpack.c.b16 %v796, %v795
    %v800 = vpack.c.b16 %v798, %v797
    %v804 = vsel %vm309, %v780, 0
    %806 = vmatprep.subr.bf16.mxu0 0
    %807 = vmatpush1.bf16.msra.mxu0 %v799
    %808 = vmatprep.subr.bf16.mxu0 0
    %809 = vmatpush1.bf16.msra.mxu0 %v800
    %810 = vmatprep.subr.bf16.mxu0 0
    %811 = vmatpush1.bf16.msra.mxu0 0
    %812 = vmatprep.subr.bf16.mxu0 0
    %813 = vmatpush1.bf16.msra.mxu0 0
    %814 = vmatprep.subr.bf16.mxu0 0
    %815 = vmatpush1.bf16.msra.mxu0 0
    %816 = vmatprep.subr.bf16.mxu0 0
    %817 = vmatpush1.bf16.msra.mxu0 0
    %818 = vmatprep.subr.bf16.mxu0 0
    %819 = vmatpush1.bf16.msra.mxu0 0
    %820 = vmatprep.subr.bf16.mxu0 0
    %821 = vmatpush1.bf16.msra.mxu0 0
    %822 = vmatprep.subr.bf16.mxu0 0
    %823 = vmatpush1.bf16.msra.mxu0 0
    %824 = vmatprep.subr.bf16.mxu0 0
    %825 = vmatpush1.bf16.msra.mxu0 0
    %826 = vmatprep.subr.bf16.mxu0 0
    %827 = vmatpush1.bf16.msra.mxu0 0
    %828 = vmatprep.subr.bf16.mxu0 0
    %829 = vmatpush1.bf16.msra.mxu0 0
    %830 = vmatprep.subr.bf16.mxu0 0
    %831 = vmatpush1.bf16.msra.mxu0 0
    %832 = vmatprep.subr.bf16.mxu0 0
    %833 = vmatpush1.bf16.msra.mxu0 0
    %834 = vmatprep.subr.bf16.mxu0 0
    %835 = vmatpush1.bf16.msra.mxu0 0
    %836 = vmatprep.subr.bf16.mxu0 0
    %837 = vmatpush1.bf16.msra.mxu0 0
    %838 = vmatprep.mubr.bf16.mxu0 0
    %839 = vmatmul.mubr.bf16.gmra.mrb[0].mxu0 %v804
    %v840 = vpop.f32.mrb[0].mxu0
    %v841 = vadd.f32 %v790, %v840
    %v842 = vpop.f32.mrb[0].mxu0
    %v843 = vpop.f32.mrb[0].mxu0
    %v844 = vadd.f32 %v790, %v843
    %v845 = vpop.f32.mrb[0].mxu0
    %846 = vdwg.mxu0
    %v847 = vpack.c.bf16 %v844, %v841
    %v848 = vadd.bf16 %v847, %v710
    %vm849 = vcmp.gt.bf16.partialorder %v848, 0
    %v850 = vmul.bf16 %v848, 1009007652
    %v851 = vsel %vm849, %v848, %v850
    %v852 = vld [vmem:[#allocation2] sm:$0xf]
    %v853 = vld [vmem:[#allocation2 + $0x4] sm:$0xf]
    %v854 = vld [vmem:[#allocation2 + $0x8] sm:$0xf]
    %v855 = vld [vmem:[#allocation2 + $0xc] sm:$0xf]
    %v856 = vld [vmem:[%s5] sm:$0x1]
    %v858 = vlaneseq
    %v859 = vshrl.u32 %v858, 7
    %v860 = vsub.s32 0, %v859
    %v861 = vrot.slane %v856, %v860
    %v867 = vunpack.c.l.b16 %v852
    %v868 = vunpack.c.l.b16 %v853
    %v869 = vunpack.c.l.b16 %v854
    %v870 = vunpack.c.l.b16 %v855
    %v871 = vpack.c.b16 %v868, %v867
    %v872 = vpack.c.b16 %v870, %v869
    %v876 = vsel %vm309, %v851, 0
    %878 = vmatprep.subr.bf16.mxu0 0
    %879 = vmatpush1.bf16.msra.mxu0 %v871
    %880 = vmatprep.subr.bf16.mxu0 0
    %881 = vmatpush1.bf16.msra.mxu0 %v872
    %882 = vmatprep.subr.bf16.mxu0 0
    %883 = vmatpush1.bf16.msra.mxu0 0
    %884 = vmatprep.subr.bf16.mxu0 0
    %885 = vmatpush1.bf16.msra.mxu0 0
    %886 = vmatprep.subr.bf16.mxu0 0
    %887 = vmatpush1.bf16.msra.mxu0 0
    %888 = vmatprep.subr.bf16.mxu0 0
    %889 = vmatpush1.bf16.msra.mxu0 0
    %890 = vmatprep.subr.bf16.mxu0 0
    %891 = vmatpush1.bf16.msra.mxu0 0
    %892 = vmatprep.subr.bf16.mxu0 0
    %893 = vmatpush1.bf16.msra.mxu0 0
    %894 = vmatprep.subr.bf16.mxu0 0
    %895 = vmatpush1.bf16.msra.mxu0 0
    %896 = vmatprep.subr.bf16.mxu0 0
    %897 = vmatpush1.bf16.msra.mxu0 0
    %898 = vmatprep.subr.bf16.mxu0 0
    %899 = vmatpush1.bf16.msra.mxu0 0
    %900 = vmatprep.subr.bf16.mxu0 0
    %901 = vmatpush1.bf16.msra.mxu0 0
    %902 = vmatprep.subr.bf16.mxu0 0
    %903 = vmatpush1.bf16.msra.mxu0 0
    %904 = vmatprep.subr.bf16.mxu0 0
    %905 = vmatpush1.bf16.msra.mxu0 0
    %906 = vmatprep.subr.bf16.mxu0 0
    %907 = vmatpush1.bf16.msra.mxu0 0
    %908 = vmatprep.subr.bf16.mxu0 0
    %909 = vmatpush1.bf16.msra.mxu0 0
    %910 = vmatprep.mubr.bf16.mxu0 0
    %911 = vmatmul.mubr.bf16.gmra.mrb[0].mxu0 %v876
    %v912 = vpop.f32.mrb[0].mxu0
    %v913 = vadd.f32 %v861, %v912
    %v914 = vpop.f32.mrb[0].mxu0
    %v915 = vpop.f32.mrb[0].mxu0
    %v916 = vadd.f32 %v861, %v915
    %v917 = vpop.f32.mrb[0].mxu0
    %918 = vdwg.mxu0
    %919 = vst [vmem:[#allocation5] sm:$0xff] %v913
    %920 = vst [vmem:[#allocation5 + $0x8] sm:$0xff] %v916
    // Predicated region
    $region30: #{tpu_custom_call.1} parent=1 // pred_check
      _
    $region31: #{tpu_custom_call.1} parent=1 // pred_check_branch
      %922 = sbr.rel (0) target = $region33
    $region32: #{tpu_custom_call.1} parent=1 // pred_region
      %s924 = ssub.s32 256, 256
      %925 = vsyncadd [#allocation4], %s924
      %s926 = sshll.u32 [#allocation5], 4
      %s927 = int_to_ptr.vmem [resolvable:$true] %s926
      %932 = dma.vmem_to_hbm [thread:$0]  %s927, 256, %s6, [#allocation4], 128, 128, 8
    $region33: #{tpu_custom_call.1} parent=1 // pred_fallthru
      _
    // Predicated region
    $region34: #{tpu_custom_call.1} parent=1 // pred_check
      _
    $region35: #{tpu_custom_call.1} parent=1 // pred_check_branch
      %934 = sbr.rel (0) target = $region37
    $region36: #{tpu_custom_call.1} parent=1 // pred_region
      %935 = dma.done [#allocation4], 256
    $region37: #{tpu_custom_call.1} parent=1 // pred_fallthru
      _
    %936 = vsyncpa [#allocation3], 1
    %937 = vsyncpa [#allocation4], 1

</llo_original>
